<compile_context>
chip_gen: v6e
topology: v6e:2x2x1
jax: 0.10.0
libtpu: 0.0.40
codegen_flags: <defaults>
</compile_context>

<pallas_src>
import functools

import jax
import jax.numpy as jnp
from jax import lax
from jax.experimental import pallas as pl
from jax.experimental.pallas import tpu as pltpu


def _sobel_kernel(x_ref, out_ref, *, H, W, B):
    """Sobel on a block of B single-channel images.

    x_ref:   (B, H, W) input block.
    out_ref: (B, 2, H, W) output block (ch 0 = Gx, ch 1 = Gy).
    """
    # Boundary masks, shared by every image in the block.
    row = lax.broadcasted_iota(jnp.int32, (H, 1), 0)
    col = lax.broadcasted_iota(jnp.int32, (1, W), 1)
    top = row == 0
    bot = row == H - 1
    left = col == 0
    right = col == W - 1

    for b in range(B):  # B is small & static: fully unrolled
        x = x_ref[b]                                          # (H, W)

        # Vertical (sublane) +/-1 neighbours via XLU roll, zero outside image.
        # pltpu.roll matches jnp.roll: roll(x, 1, 0)[i] == x[i-1];
        # roll by (H-1) is the non-negative form of roll by -1.
        x_up = jnp.where(top, 0.0, pltpu.roll(x, 1, 0))       # x[i-1, j]
        x_dn = jnp.where(bot, 0.0, pltpu.roll(x, H - 1, 0))   # x[i+1, j]

        # Separable Sobel: vertical pass.
        v = x_up + 2.0 * x + x_dn      # smoothing column for Gx
        d = x_up - x_dn                # difference column for Gy

        # Horizontal (lane) +/-1 neighbours, zero at image edges.
        v_l = jnp.where(left, 0.0, pltpu.roll(v, 1, 1))       # v[i, j-1]
        v_r = jnp.where(right, 0.0, pltpu.roll(v, W - 1, 1))  # v[i, j+1]
        d_l = jnp.where(left, 0.0, pltpu.roll(d, 1, 1))
        d_r = jnp.where(right, 0.0, pltpu.roll(d, W - 1, 1))

        # edge_kx = [[-1,0,1],[-2,0,2],[-1,0,1]]
        # edge_ky = [[1,2,1],[0,0,0],[-1,-2,-1]]
        out_ref[b, 0] = (v_r - v_l).astype(out_ref.dtype)
        out_ref[b, 1] = (d_l + 2.0 * d + d_r).astype(out_ref.dtype)


def sobel(x, *, plane_bytes_cap=512 * 1024, max_fold=16):
    """Pallas equivalent of Sobel.forward. x: (N, 1, H, W)."""
    N, C, H, W = x.shape
    assert C == 1, "Sobel module expects a single input channel"
    itemsize = jnp.dtype(x.dtype).itemsize

    # Fold B images per grid step (B divides N, per-step input block stays
    # under the VMEM budget, unroll bounded by max_fold).
    B = 1
    for cand in range(1, min(N, max_fold) + 1):
        if N % cand == 0 and cand * H * W * itemsize <= plane_bytes_cap:
            B = cand
    G = N // B
    # TODO(synk): row-tile H with a 2-row halo (pl.Element offsets) for images
    # whose single plane exceeds the per-step VMEM budget (B == 1 case).

    x3 = x.reshape(N, H, W)  # free view: drop the single channel dim
    kernel = functools.partial(_sobel_kernel, H=H, W=W, B=B)

    out = pl.pallas_call(
        kernel,
        out_shape=jax.ShapeDtypeStruct((N, 2, H, W), x.dtype),
        grid=(G,),
        in_specs=[pl.BlockSpec((B, H, W), lambda i: (i, 0, 0))],
        out_specs=pl.BlockSpec((B, 2, H, W), lambda i: (i, 0, 0, 0)),
        compiler_params=pltpu.CompilerParams(
            dimension_semantics=("parallel",),
            vmem_limit_bytes=32 * 1024 * 1024,
        ),
        cost_estimate=pl.CostEstimate(
            flops=14 * N * H * W,
            transcendentals=0,
            bytes_accessed=3 * N * H * W * itemsize,
        ),
    )(x3)

    # Matches `out.contiguous().view(-1, 2, H, W)` (a no-op here).
    return out.reshape(-1, 2, H, W)


def _reference(x):
    """Pure-JAX reference using lax conv (PyTorch cross-correlation semantics)."""
    edge_kx = jnp.array([[-1, 0, 1], [-2, 0, 2], [-1, 0, 1]], jnp.float32)
    edge_ky = jnp.array([[1, 2, 1], [0, 0, 0], [-1, -2, -1]], jnp.float32)
    w = jnp.stack([edge_kx, edge_ky])[:, None, :, :]  # (2, 1, 3, 3) OIHW
    out = jax.lax.conv_general_dilated(
        x, w, window_strides=(1, 1), padding=((1, 1), (1, 1)),
        dimension_numbers=("NCHW", "OIHW", "NCHW"))
    return out.reshape(-1, 2, x.shape[2], x.shape[3])


if __name__ == "__main__":
    key = jax.random.PRNGKey(0)
    N, C, H, W = 2, 1, 16, 16  # Conv2d(1, 2, ...) => single input channel
    x = jax.random.normal(key, (N, C, H, W), dtype=jnp.float32)

    out = sobel(x)
    jax.block_until_ready(out)

    ref = _reference(x)
    assert out.shape == (N, 2, H, W)
    assert jnp.allclose(out, ref, atol=1e-5, rtol=1e-5), "mismatch vs reference"

    print("KERNEL_OK")
</pallas_src>

<mosaic_0001>
module attributes {stable_mosaic.version = 11 : i64} {
  func.func @_sobel_kernel(%arg0: i32, %arg1: memref<2x16x16xf32, #tpu.memory_space<vmem>>, %arg2: memref<2x2x16x16xf32, #tpu.memory_space<vmem>>) attributes {dimension_semantics = [#tpu.dimension_semantics<parallel>], iteration_bounds = array<i64: 1>, scalar_prefetch = 0 : i64, scratch_operands = 0 : i64, tpu.core_type = #tpu.core_type<tc>, window_params = [{transform_indices = @transform_0, window_bounds = array<i64: 2, 16, 16>}, {transform_indices = @transform_1, window_bounds = array<i64: 2, 2, 16, 16>}]} {
    %0 = tpu.iota {dimensions = array<i32: 0>} : vector<16x1xi32>
    %1 = tpu.iota {dimensions = array<i32: 1>} : vector<1x16xi32>
    %c0_i32 = arith.constant 0 : i32
    %2 = vector.broadcast %c0_i32 : i32 to vector<16x1xi32>
    %3 = arith.cmpi eq, %0, %2 : vector<16x1xi32>
    %c15_i32 = arith.constant 15 : i32
    %4 = vector.broadcast %c15_i32 : i32 to vector<16x1xi32>
    %5 = arith.cmpi eq, %0, %4 : vector<16x1xi32>
    %c0_i32_0 = arith.constant 0 : i32
    %6 = vector.broadcast %c0_i32_0 : i32 to vector<1x16xi32>
    %7 = arith.cmpi eq, %1, %6 : vector<1x16xi32>
    %c15_i32_1 = arith.constant 15 : i32
    %8 = vector.broadcast %c15_i32_1 : i32 to vector<1x16xi32>
    %9 = arith.cmpi eq, %1, %8 : vector<1x16xi32>
    %c0 = arith.constant 0 : index
    %c0_2 = arith.constant 0 : index
    %c0_3 = arith.constant 0 : index
    %10 = vector.load %arg1[%c0, %c0_2, %c0_3] : memref<2x16x16xf32, #tpu.memory_space<vmem>>, vector<1x16x16xf32>
    %11 = vector.shape_cast %10 : vector<1x16x16xf32> to vector<16x16xf32>
    %c1_i32 = arith.constant 1 : i32
    %12 = tpu.dynamic_rotate %11 by %c1_i32 dim 0 : vector<16x16xf32>, i32 -> vector<16x16xf32>
    %cst = arith.constant 0.000000e+00 : f32
    %13 = vector.shape_cast %3 : vector<16x1xi1> to vector<16x1xi1>
    %14 = vector.broadcast %13 : vector<16x1xi1> to vector<16x16xi1>
    %15 = vector.broadcast %cst : f32 to vector<16x16xf32>
    %16 = arith.select %14, %15, %12 : vector<16x16xi1>, vector<16x16xf32>
    %c15_i32_4 = arith.constant 15 : i32
    %17 = tpu.dynamic_rotate %11 by %c15_i32_4 dim 0 : vector<16x16xf32>, i32 -> vector<16x16xf32>
    %cst_5 = arith.constant 0.000000e+00 : f32
    %18 = vector.shape_cast %5 : vector<16x1xi1> to vector<16x1xi1>
    %19 = vector.broadcast %18 : vector<16x1xi1> to vector<16x16xi1>
    %20 = vector.broadcast %cst_5 : f32 to vector<16x16xf32>
    %21 = arith.select %19, %20, %17 : vector<16x16xi1>, vector<16x16xf32>
    %cst_6 = arith.constant 2.000000e+00 : f32
    %22 = vector.broadcast %cst_6 : f32 to vector<16x16xf32>
    %23 = arith.mulf %22, %11 : vector<16x16xf32>
    %24 = arith.addf %16, %23 : vector<16x16xf32>
    %25 = arith.addf %24, %21 : vector<16x16xf32>
    %26 = arith.subf %16, %21 : vector<16x16xf32>
    %c1_i32_7 = arith.constant 1 : i32
    %27 = tpu.dynamic_rotate %25 by %c1_i32_7 dim 1 : vector<16x16xf32>, i32 -> vector<16x16xf32>
    %cst_8 = arith.constant 0.000000e+00 : f32
    %28 = vector.shape_cast %7 : vector<1x16xi1> to vector<1x16xi1>
    %29 = vector.broadcast %28 : vector<1x16xi1> to vector<16x16xi1>
    %30 = vector.broadcast %cst_8 : f32 to vector<16x16xf32>
    %31 = arith.select %29, %30, %27 : vector<16x16xi1>, vector<16x16xf32>
    %c15_i32_9 = arith.constant 15 : i32
    %32 = tpu.dynamic_rotate %25 by %c15_i32_9 dim 1 : vector<16x16xf32>, i32 -> vector<16x16xf32>
    %cst_10 = arith.constant 0.000000e+00 : f32
    %33 = vector.shape_cast %9 : vector<1x16xi1> to vector<1x16xi1>
    %34 = vector.broadcast %33 : vector<1x16xi1> to vector<16x16xi1>
    %35 = vector.broadcast %cst_10 : f32 to vector<16x16xf32>
    %36 = arith.select %34, %35, %32 : vector<16x16xi1>, vector<16x16xf32>
    %c1_i32_11 = arith.constant 1 : i32
    %37 = tpu.dynamic_rotate %26 by %c1_i32_11 dim 1 : vector<16x16xf32>, i32 -> vector<16x16xf32>
    %cst_12 = arith.constant 0.000000e+00 : f32
    %38 = vector.shape_cast %7 : vector<1x16xi1> to vector<1x16xi1>
    %39 = vector.broadcast %38 : vector<1x16xi1> to vector<16x16xi1>
    %40 = vector.broadcast %cst_12 : f32 to vector<16x16xf32>
    %41 = arith.select %39, %40, %37 : vector<16x16xi1>, vector<16x16xf32>
    %c15_i32_13 = arith.constant 15 : i32
    %42 = tpu.dynamic_rotate %26 by %c15_i32_13 dim 1 : vector<16x16xf32>, i32 -> vector<16x16xf32>
    %cst_14 = arith.constant 0.000000e+00 : f32
    %43 = vector.shape_cast %9 : vector<1x16xi1> to vector<1x16xi1>
    %44 = vector.broadcast %43 : vector<1x16xi1> to vector<16x16xi1>
    %45 = vector.broadcast %cst_14 : f32 to vector<16x16xf32>
    %46 = arith.select %44, %45, %42 : vector<16x16xi1>, vector<16x16xf32>
    %47 = arith.subf %36, %31 : vector<16x16xf32>
    %c0_15 = arith.constant 0 : index
    %c0_16 = arith.constant 0 : index
    %c0_17 = arith.constant 0 : index
    %c0_18 = arith.constant 0 : index
    %48 = vector.load %arg2[%c0_15, %c0_16, %c0_17, %c0_18] : memref<2x2x16x16xf32, #tpu.memory_space<vmem>>, vector<1x1x16x16xf32>
    %49 = vector.shape_cast %48 : vector<1x1x16x16xf32> to vector<16x16xf32>
    %50 = vector.shape_cast %47 : vector<16x16xf32> to vector<1x1x16x16xf32>
    tpu.vector_store %arg2[%c0_15, %c0_16, %c0_17, %c0_18], %50 {strides = array<i32>} : memref<2x2x16x16xf32, #tpu.memory_space<vmem>>, vector<1x1x16x16xf32>,
    %cst_19 = arith.constant 2.000000e+00 : f32
    %51 = vector.broadcast %cst_19 : f32 to vector<16x16xf32>
    %52 = arith.mulf %51, %26 : vector<16x16xf32>
    %53 = arith.addf %41, %52 : vector<16x16xf32>
    %54 = arith.addf %53, %46 : vector<16x16xf32>
    %c0_20 = arith.constant 0 : index
    %c1 = arith.constant 1 : index
    %c0_21 = arith.constant 0 : index
    %c0_22 = arith.constant 0 : index
    %55 = vector.load %arg2[%c0_20, %c1, %c0_21, %c0_22] : memref<2x2x16x16xf32, #tpu.memory_space<vmem>>, vector<1x1x16x16xf32>
    %56 = vector.shape_cast %55 : vector<1x1x16x16xf32> to vector<16x16xf32>
    %57 = vector.shape_cast %54 : vector<16x16xf32> to vector<1x1x16x16xf32>
    tpu.vector_store %arg2[%c0_20, %c1, %c0_21, %c0_22], %57 {strides = array<i32>} : memref<2x2x16x16xf32, #tpu.memory_space<vmem>>, vector<1x1x16x16xf32>,
    %c1_23 = arith.constant 1 : index
    %c0_24 = arith.constant 0 : index
    %c0_25 = arith.constant 0 : index
    %58 = vector.load %arg1[%c1_23, %c0_24, %c0_25] : memref<2x16x16xf32, #tpu.memory_space<vmem>>, vector<1x16x16xf32>
    %59 = vector.shape_cast %58 : vector<1x16x16xf32> to vector<16x16xf32>
    %c1_i32_26 = arith.constant 1 : i32
    %60 = tpu.dynamic_rotate %59 by %c1_i32_26 dim 0 : vector<16x16xf32>, i32 -> vector<16x16xf32>
    %cst_27 = arith.constant 0.000000e+00 : f32
    %61 = vector.shape_cast %3 : vector<16x1xi1> to vector<16x1xi1>
    %62 = vector.broadcast %61 : vector<16x1xi1> to vector<16x16xi1>
    %63 = vector.broadcast %cst_27 : f32 to vector<16x16xf32>
    %64 = arith.select %62, %63, %60 : vector<16x16xi1>, vector<16x16xf32>
    %c15_i32_28 = arith.constant 15 : i32
    %65 = tpu.dynamic_rotate %59 by %c15_i32_28 dim 0 : vector<16x16xf32>, i32 -> vector<16x16xf32>
    %cst_29 = arith.constant 0.000000e+00 : f32
    %66 = vector.shape_cast %5 : vector<16x1xi1> to vector<16x1xi1>
    %67 = vector.broadcast %66 : vector<16x1xi1> to vector<16x16xi1>
    %68 = vector.broadcast %cst_29 : f32 to vector<16x16xf32>
    %69 = arith.select %67, %68, %65 : vector<16x16xi1>, vector<16x16xf32>
    %cst_30 = arith.constant 2.000000e+00 : f32
    %70 = vector.broadcast %cst_30 : f32 to vector<16x16xf32>
    %71 = arith.mulf %70, %59 : vector<16x16xf32>
    %72 = arith.addf %64, %71 : vector<16x16xf32>
    %73 = arith.addf %72, %69 : vector<16x16xf32>
    %74 = arith.subf %64, %69 : vector<16x16xf32>
    %c1_i32_31 = arith.constant 1 : i32
    %75 = tpu.dynamic_rotate %73 by %c1_i32_31 dim 1 : vector<16x16xf32>, i32 -> vector<16x16xf32>
    %cst_32 = arith.constant 0.000000e+00 : f32
    %76 = vector.shape_cast %7 : vector<1x16xi1> to vector<1x16xi1>
    %77 = vector.broadcast %76 : vector<1x16xi1> to vector<16x16xi1>
    %78 = vector.broadcast %cst_32 : f32 to vector<16x16xf32>
    %79 = arith.select %77, %78, %75 : vector<16x16xi1>, vector<16x16xf32>
    %c15_i32_33 = arith.constant 15 : i32
    %80 = tpu.dynamic_rotate %73 by %c15_i32_33 dim 1 : vector<16x16xf32>, i32 -> vector<16x16xf32>
    %cst_34 = arith.constant 0.000000e+00 : f32
    %81 = vector.shape_cast %9 : vector<1x16xi1> to vector<1x16xi1>
    %82 = vector.broadcast %81 : vector<1x16xi1> to vector<16x16xi1>
    %83 = vector.broadcast %cst_34 : f32 to vector<16x16xf32>
    %84 = arith.select %82, %83, %80 : vector<16x16xi1>, vector<16x16xf32>
    %c1_i32_35 = arith.constant 1 : i32
    %85 = tpu.dynamic_rotate %74 by %c1_i32_35 dim 1 : vector<16x16xf32>, i32 -> vector<16x16xf32>
    %cst_36 = arith.constant 0.000000e+00 : f32
    %86 = vector.shape_cast %7 : vector<1x16xi1> to vector<1x16xi1>
    %87 = vector.broadcast %86 : vector<1x16xi1> to vector<16x16xi1>
    %88 = vector.broadcast %cst_36 : f32 to vector<16x16xf32>
    %89 = arith.select %87, %88, %85 : vector<16x16xi1>, vector<16x16xf32>
    %c15_i32_37 = arith.constant 15 : i32
    %90 = tpu.dynamic_rotate %74 by %c15_i32_37 dim 1 : vector<16x16xf32>, i32 -> vector<16x16xf32>
    %cst_38 = arith.constant 0.000000e+00 : f32
    %91 = vector.shape_cast %9 : vector<1x16xi1> to vector<1x16xi1>
    %92 = vector.broadcast %91 : vector<1x16xi1> to vector<16x16xi1>
    %93 = vector.broadcast %cst_38 : f32 to vector<16x16xf32>
    %94 = arith.select %92, %93, %90 : vector<16x16xi1>, vector<16x16xf32>
    %95 = arith.subf %84, %79 : vector<16x16xf32>
    %c1_39 = arith.constant 1 : index
    %c0_40 = arith.constant 0 : index
    %c0_41 = arith.constant 0 : index
    %c0_42 = arith.constant 0 : index
    %96 = vector.load %arg2[%c1_39, %c0_40, %c0_41, %c0_42] : memref<2x2x16x16xf32, #tpu.memory_space<vmem>>, vector<1x1x16x16xf32>
    %97 = vector.shape_cast %96 : vector<1x1x16x16xf32> to vector<16x16xf32>
    %98 = vector.shape_cast %95 : vector<16x16xf32> to vector<1x1x16x16xf32>
    tpu.vector_store %arg2[%c1_39, %c0_40, %c0_41, %c0_42], %98 {strides = array<i32>} : memref<2x2x16x16xf32, #tpu.memory_space<vmem>>, vector<1x1x16x16xf32>,
    %cst_43 = arith.constant 2.000000e+00 : f32
    %99 = vector.broadcast %cst_43 : f32 to vector<16x16xf32>
    %100 = arith.mulf %99, %74 : vector<16x16xf32>
    %101 = arith.addf %89, %100 : vector<16x16xf32>
    %102 = arith.addf %101, %94 : vector<16x16xf32>
    %c1_44 = arith.constant 1 : index
    %c1_45 = arith.constant 1 : index
    %c0_46 = arith.constant 0 : index
    %c0_47 = arith.constant 0 : index
    %103 = vector.load %arg2[%c1_44, %c1_45, %c0_46, %c0_47] : memref<2x2x16x16xf32, #tpu.memory_space<vmem>>, vector<1x1x16x16xf32>
    %104 = vector.shape_cast %103 : vector<1x1x16x16xf32> to vector<16x16xf32>
    %105 = vector.shape_cast %102 : vector<16x16xf32> to vector<1x1x16x16xf32>
    tpu.vector_store %arg2[%c1_44, %c1_45, %c0_46, %c0_47], %105 {strides = array<i32>} : memref<2x2x16x16xf32, #tpu.memory_space<vmem>>, vector<1x1x16x16xf32>,
    return
  }
  func.func @transform_0(%arg0: i32) -> (i32, i32, i32) {
    %c0_i32 = arith.constant 0 : i32
    %c0_i32_0 = arith.constant 0 : i32
    %c0_i32_1 = arith.constant 0 : i32
    return %arg0, %c0_i32, %c0_i32_0 : i32, i32, i32
  }
  func.func @transform_1(%arg0: i32) -> (i32, i32, i32, i32) {
    %c0_i32 = arith.constant 0 : i32
    %c0_i32_0 = arith.constant 0 : i32
    %c0_i32_1 = arith.constant 0 : i32
    %c0_i32_2 = arith.constant 0 : i32
    return %arg0, %c0_i32, %c0_i32_0, %c0_i32_1 : i32, i32, i32, i32
  }
}

</mosaic_0001>

<llo_original>
// kernel: tpu_custom_call.1
$region0: #{tpu_custom_call.1}
  #allocation0 [shape = 'u32[]', space=smem, size = 0x4, offset = 0x4, fixed_abs, tag = 'smem constant byte address 0x4 - core index']
  #allocation1 [shape = 'u32[144,128]{1,0:T(1,128)}', space=vmem, size = 0x12000, scoped, tag = 'internal scratch']
  %s0 = inlined_call_operand.hbm [shape: f32[2,16,16], index: 0, kind: input, shape index: {}]
  %s1 = inlined_call_operand.hbm [shape: f32[2,2,16,16], index: 1, kind: output, shape index: {}]
  %s2 = sld [smem:[#allocation0]]
  $region18: #{tpu_custom_call.1} parent=0
    _
  %s4 = ssub.s32 1, %s2
  %s5 = scalar_select 0, %s4, %s2
  $region1: #{tpu_custom_call.1} parent=0
    #allocation2 [shape = 'u8[16384]{0}', space=vmem, size = 0x4000, scoped, tag = 'input window, operand 0, single buffered']
    #allocation3 [shape = 's32[1]{0}', space=sflag, size = 0x4, scoped, tag = 'scoped memory for tpu_custom_call.1']
    #allocation4 [shape = 's32[1]{0}', space=sflag, size = 0x4, scoped, tag = 'scoped memory for tpu_custom_call.1']
    #allocation5 [shape = 'u8[32768]{0}', space=vmem, size = 0x8000, scoped, tag = 'output window, operand 0, single buffered']
    %6 = vsyncpa [#allocation3], 0
    %7 = vsyncpa [#allocation4], 0
    // Predicated region
    $region2: #{tpu_custom_call.1} parent=1 // pred_check
      _
    $region3: #{tpu_custom_call.1} parent=1 // pred_check_branch
      %9 = sbr.rel (0) target = $region5
    $region4: #{tpu_custom_call.1} parent=1 // pred_region
      %s11 = ssub.s32 512, 512
      %12 = vsyncadd [#allocation3], %s11
      %s13 = sshll.u32 [#allocation2], 4
      %s14 = int_to_ptr.vmem [resolvable:$true] %s13
      %19 = dma.hbm_to_vmem [thread:$0]  %s0, 512, %s14, [#allocation3], 128, 128, 8
    $region5: #{tpu_custom_call.1} parent=1 // pred_fallthru
      _
    // Predicated region
    $region6: #{tpu_custom_call.1} parent=1 // pred_check
      _
    $region7: #{tpu_custom_call.1} parent=1 // pred_check_branch
      %21 = sbr.rel (0) target = $region9
    $region8: #{tpu_custom_call.1} parent=1 // pred_region
      %22 = dma.done [#allocation3], 512
    $region9: #{tpu_custom_call.1} parent=1 // pred_fallthru
      _
    %v23 = vlaneseq
    %v24 = vshrl.u32 %v23, 7
    %v25 = vadd.s32 %v24, 8
    %v26 = vlaneseq
    %v27 = vand.u32 %v26, 127
    %vm28 = vcmp.eq.s32.totalorder %v24, 0
    %vm29 = vcmp.eq.s32.totalorder %v25, 0
    %vm30 = vcmp.eq.s32.totalorder %v24, 15
    %vm31 = vcmp.eq.s32.totalorder %v25, 15
    %vm32 = vcmp.eq.s32.totalorder %v27, 0
    %vm33 = vcmp.eq.s32.totalorder %v27, 15
    %v34 = vld [vmem:[#allocation2] sm:$0xff]
    %v35 = vld [vmem:[#allocation2 + $0x8] sm:$0xff]
    %v36 = vrot.slane %v34, 7
    %v37 = vrot.slane %v35, 7
    %vm38 = vcmp.lt.s32.totalorder %v24, 1
    %v39 = vsel %vm38, %v36, %v37
    %v40 = vsel %vm38, %v37, %v36
    %v41 = vsel %vm28, 1, 0
    %v42 = vsel %vm29, 1, 0
    %vm43 = vcmp.eq.s32.totalorder %v41, 1
    %vm44 = vcmp.eq.s32.totalorder %v42, 1
    %v45 = vsel %vm43, 0.0, %v40
    %v46 = vsel %vm44, 0.0, %v39
    %v47 = vrot.slane %v34, 1
    %v48 = vrot.slane %v35, 1
    %vm49 = vcmp.lt.s32.totalorder %v24, 7
    %v50 = vsel %vm49, %v47, %v48
    %v51 = vsel %vm49, %v48, %v47
    %v52 = vsel %vm30, 1, 0
    %v53 = vsel %vm31, 1, 0
    %vm54 = vcmp.eq.s32.totalorder %v52, 1
    %vm55 = vcmp.eq.s32.totalorder %v53, 1
    %v56 = vsel %vm54, 0.0, %v50
    %v57 = vsel %vm55, 0.0, %v51
    %v58 = vmul.f32 %v34, 2.0
    %v59 = vmul.f32 %v35, 2.0
    %v60 = vadd.f32 %v45, %v58
    %v61 = vadd.f32 %v46, %v59
    %v62 = vadd.f32 %v60, %v56
    %v63 = vadd.f32 %v61, %v57
    %v64 = vsub.f32 %v45, %v56
    %v65 = vsub.f32 %v46, %v57
    %vm66 = vcmask 1047680
    %67 = vrot.lane.b32.xlu0 %v62, 16
    %v68 = vpop.permute.xlu0 %67
    %v69 = vsel %vm66, %v68, %v62
    %70 = vrot.lane.b32.xlu0 %v63, 16
    %v71 = vpop.permute.xlu0 %70
    %v72 = vsel %vm66, %v71, %v63
    %73 = vrot.lane.b32.xlu0 %v69, 16
    %v74 = vpop.permute.xlu0 %73
    %75 = vrot.lane.b32.xlu0 %v72, 16
    %v76 = vpop.permute.xlu0 %75
    %v77 = vsel %vm66, %v74, %v62
    %v78 = vsel %vm66, %v76, %v63
    %v79 = vsel %vm32, 1, 0
    %vm80 = vcmp.eq.s32.totalorder %v79, 1
    %83 = vrot.lane.b32.xlu0 %v77, 113
    %v84 = vpop.permute.xlu0 %83
    %85 = vrot.lane.b32.xlu0 %v78, 113
    %v86 = vpop.permute.xlu0 %85
    %v89 = vsel %vm80, 0.0, %v84
    %v90 = vsel %vm80, 0.0, %v86
    %v91 = vsel %vm33, 1, 0
    %vm92 = vcmp.eq.s32.totalorder %v91, 1
    %93 = vrot.lane.b32.xlu0 %v77, 127
    %v94 = vpop.permute.xlu0 %93
    %95 = vrot.lane.b32.xlu0 %v78, 127
    %v96 = vpop.permute.xlu0 %95
    %v99 = vsel %vm92, 0.0, %v94
    %v100 = vsel %vm92, 0.0, %v96
    %101 = vrot.lane.b32.xlu0 %v64, 16
    %v102 = vpop.permute.xlu0 %101
    %v103 = vsel %vm66, %v102, %v64
    %104 = vrot.lane.b32.xlu0 %v65, 16
    %v105 = vpop.permute.xlu0 %104
    %v106 = vsel %vm66, %v105, %v65
    %107 = vrot.lane.b32.xlu0 %v103, 16
    %v108 = vpop.permute.xlu0 %107
    %109 = vrot.lane.b32.xlu0 %v106, 16
    %v110 = vpop.permute.xlu0 %109
    %v111 = vsel %vm66, %v108, %v64
    %v112 = vsel %vm66, %v110, %v65
    %115 = vrot.lane.b32.xlu0 %v111, 113
    %v116 = vpop.permute.xlu0 %115
    %117 = vrot.lane.b32.xlu0 %v112, 113
    %v118 = vpop.permute.xlu0 %117
    %v121 = vsel %vm80, 0.0, %v116
    %v122 = vsel %vm80, 0.0, %v118
    %123 = vrot.lane.b32.xlu0 %v111, 127
    %v124 = vpop.permute.xlu0 %123
    %125 = vrot.lane.b32.xlu0 %v112, 127
    %v126 = vpop.permute.xlu0 %125
    %v129 = vsel %vm92, 0.0, %v124
    %v130 = vsel %vm92, 0.0, %v126
    %v131 = vsub.f32 %v99, %v89
    %v132 = vsub.f32 %v100, %v90
    %vm133 = vcmask 130048
    %134 = vst.msk [vmem:[#allocation5] sm:$0xff] %vm133, %v131
    %135 = vst.msk [vmem:[#allocation5 + $0x8] sm:$0xff] %vm133, %v132
    %v136 = vmul.f32 %v64, 2.0
    %v137 = vmul.f32 %v65, 2.0
    %v138 = vadd.f32 %v121, %v136
    %v139 = vadd.f32 %v122, %v137
    %v140 = vadd.f32 %v138, %v129
    %v141 = vadd.f32 %v139, %v130
    %s142 = scalar_lea.vmem [#allocation5], 16
    %143 = vst.msk [vmem:[%s142] sm:$0xff] %vm133, %v140
    %144 = vst.msk [vmem:[%s142 + $0x8] sm:$0xff] %vm133, %v141
    %s145 = scalar_lea.vmem [#allocation2], 16
    %v146 = vld [vmem:[%s145] sm:$0xff]
    %v147 = vld [vmem:[%s145 + $0x8] sm:$0xff]
    %v148 = vrot.slane %v146, 7
    %v149 = vrot.slane %v147, 7
    %v150 = vsel %vm38, %v148, %v149
    %v151 = vsel %vm38, %v149, %v148
    %v152 = vsel %vm43, 0.0, %v151
    %v153 = vsel %vm44, 0.0, %v150
    %v154 = vrot.slane %v146, 1
    %v155 = vrot.slane %v147, 1
    %v156 = vsel %vm49, %v154, %v155
    %v157 = vsel %vm49, %v155, %v154
    %v158 = vsel %vm54, 0.0, %v156
    %v159 = vsel %vm55, 0.0, %v157
    %v160 = vmul.f32 %v146, 2.0
    %v161 = vmul.f32 %v147, 2.0
    %v162 = vadd.f32 %v152, %v160
    %v163 = vadd.f32 %v153, %v161
    %v164 = vadd.f32 %v162, %v158
    %v165 = vadd.f32 %v163, %v159
    %v166 = vsub.f32 %v152, %v158
    %v167 = vsub.f32 %v153, %v159
    %168 = vrot.lane.b32.xlu0 %v164, 16
    %v169 = vpop.permute.xlu0 %168
    %v170 = vsel %vm66, %v169, %v164
    %171 = vrot.lane.b32.xlu0 %v165, 16
    %v172 = vpop.permute.xlu0 %171
    %v173 = vsel %vm66, %v172, %v165
    %174 = vrot.lane.b32.xlu0 %v170, 16
    %v175 = vpop.permute.xlu0 %174
    %176 = vrot.lane.b32.xlu0 %v173, 16
    %v177 = vpop.permute.xlu0 %176
    %v178 = vsel %vm66, %v175, %v164
    %v179 = vsel %vm66, %v177, %v165
    %182 = vrot.lane.b32.xlu0 %v178, 113
    %v183 = vpop.permute.xlu0 %182
    %184 = vrot.lane.b32.xlu0 %v179, 113
    %v185 = vpop.permute.xlu0 %184
    %v188 = vsel %vm80, 0.0, %v183
    %v189 = vsel %vm80, 0.0, %v185
    %190 = vrot.lane.b32.xlu0 %v178, 127
    %v191 = vpop.permute.xlu0 %190
    %192 = vrot.lane.b32.xlu0 %v179, 127
    %v193 = vpop.permute.xlu0 %192
    %v196 = vsel %vm92, 0.0, %v191
    %v197 = vsel %vm92, 0.0, %v193
    %198 = vrot.lane.b32.xlu0 %v166, 16
    %v199 = vpop.permute.xlu0 %198
    %v200 = vsel %vm66, %v199, %v166
    %201 = vrot.lane.b32.xlu0 %v167, 16
    %v202 = vpop.permute.xlu0 %201
    %v203 = vsel %vm66, %v202, %v167
    %204 = vrot.lane.b32.xlu0 %v200, 16
    %v205 = vpop.permute.xlu0 %204
    %206 = vrot.lane.b32.xlu0 %v203, 16
    %v207 = vpop.permute.xlu0 %206
    %v208 = vsel %vm66, %v205, %v166
    %v209 = vsel %vm66, %v207, %v167
    %212 = vrot.lane.b32.xlu0 %v208, 113
    %v213 = vpop.permute.xlu0 %212
    %214 = vrot.lane.b32.xlu0 %v209, 113
    %v215 = vpop.permute.xlu0 %214
    %v218 = vsel %vm80, 0.0, %v213
    %v219 = vsel %vm80, 0.0, %v215
    %220 = vrot.lane.b32.xlu0 %v208, 127
    %v221 = vpop.permute.xlu0 %220
    %222 = vrot.lane.b32.xlu0 %v209, 127
    %v223 = vpop.permute.xlu0 %222
    %v226 = vsel %vm92, 0.0, %v221
    %v227 = vsel %vm92, 0.0, %v223
    %v228 = vsub.f32 %v196, %v188
    %v229 = vsub.f32 %v197, %v189
    %s230 = scalar_lea.vmem [#allocation5], 32
    %231 = vst.msk [vmem:[%s230] sm:$0xff] %vm133, %v228
    %232 = vst.msk [vmem:[%s230 + $0x8] sm:$0xff] %vm133, %v229
    %v233 = vmul.f32 %v166, 2.0
    %v234 = vmul.f32 %v167, 2.0
    %v235 = vadd.f32 %v218, %v233
    %v236 = vadd.f32 %v219, %v234
    %v237 = vadd.f32 %v235, %v226
    %v238 = vadd.f32 %v236, %v227
    %s239 = scalar_lea.vmem [#allocation5], 48
    %240 = vst.msk [vmem:[%s239] sm:$0xff] %vm133, %v237
    %241 = vst.msk [vmem:[%s239 + $0x8] sm:$0xff] %vm133, %v238
    // Predicated region
    $region10: #{tpu_custom_call.1} parent=1 // pred_check
      _
    $region11: #{tpu_custom_call.1} parent=1 // pred_check_branch
      %243 = sbr.rel (0) target = $region13
    $region12: #{tpu_custom_call.1} parent=1 // pred_region
      %s245 = ssub.s32 1024, 1024
      %246 = vsyncadd [#allocation4], %s245
      %s247 = sshll.u32 [#allocation5], 4
      %s248 = int_to_ptr.vmem [resolvable:$true] %s247
      %253 = dma.vmem_to_hbm [thread:$0]  %s248, 1024, %s1, [#allocation4], 128, 128, 8
    $region13: #{tpu_custom_call.1} parent=1 // pred_fallthru
      _
    // Predicated region
    $region14: #{tpu_custom_call.1} parent=1 // pred_check
      _
    $region15: #{tpu_custom_call.1} parent=1 // pred_check_branch
      %255 = sbr.rel (0) target = $region17
    $region16: #{tpu_custom_call.1} parent=1 // pred_region
      %256 = dma.done [#allocation4], 1024
    $region17: #{tpu_custom_call.1} parent=1 // pred_fallthru
      _
    %257 = vsyncpa [#allocation3], 1
    %258 = vsyncpa [#allocation4], 1

</llo_original>
